<compile_context>
chip_gen: v7x
topology: tpu7x:2x2x1
jax: 0.10.0
libtpu: 0.0.40
codegen_flags: <defaults>
</compile_context>

<pallas_src>
import functools

import jax
import jax.numpy as jnp
from jax.experimental import pallas as pl
from jax.experimental.pallas import tpu as pltpu


def _round_up(x, m):
    return (x + m - 1) // m * m


def _vmem_capacity_bytes():
    """Per-core VMEM capacity; conservative fallback if the query is unavailable."""
    try:
        cap = getattr(pltpu.get_tpu_info(), "vmem_capacity_bytes", None)
        if cap:
            return int(cap)
    except Exception:
        pass
    return 64 * 1024 * 1024  # v7x per-TC physical VMEM; safe lower bound everywhere


def _pick_tiles(B, C, itemsize, vmem_limit_bytes, block_rows, block_cols):
    """Size (tb, tc) so double-buffered native input + ~3 f32-wide elementwise
    temporaries fit comfortably inside the VMEM limit."""
    per_elem = 2 * itemsize + 12                       # 2x input bufs + f32 temps
    elem_budget = max((4 * vmem_limit_bytes) // (5 * per_elem), 8 * 128)

    # Class tile: keep the class axis whole unless even a 64-row tile would
    # blow VMEM; otherwise a multiple of 128 sized for ~256-row batch tiles.
    if block_cols is not None:
        tc = block_cols if block_cols >= C else max(128, (block_cols // 128) * 128)
    elif 64 * C <= elem_budget:
        tc = C
    else:
        tc = max(128, ((elem_budget // 256) // 128) * 128)
    tc = C if tc >= C else tc

    # Batch tile: as large as VMEM allows, capped by the (8-rounded) batch and
    # kept to >= 2 grid blocks so both v7x TensorCores get work.
    if block_rows is not None:
        tb = _round_up(max(8, min(block_rows, _round_up(B, 8))), 8)
    else:
        tb = max(8, (elem_budget // max(tc, 1)) // 8 * 8)
        tb = min(tb, _round_up(B, 8))
        if B > 8:
            tb = min(tb, _round_up(pl.cdiv(B, 2), 8))
    return tb, tc


def _ce_kernel(logits_ref, labels_ref, partial_ref, m_sc, se_sc, wx_sc, *,
               epsilon, num_classes, total_rows, block_rows, block_cols,
               class_tail):
    # logits_ref : (tb, tc) native dtype          labels_ref : (tb, 1) int32
    # partial_ref: (1, 8, 128) f32 per-batch-block partial loss
    # m_sc/se_sc/wx_sc: (tb, 1) f32 running max / sum-exp / weighted-sum
    i = pl.program_id(0)
    k = pl.program_id(1)

    @pl.when(k == 0)
    def _init():
        m_sc[...] = jnp.full_like(m_sc, -jnp.inf)
        se_sc[...] = jnp.zeros_like(se_sc)
        wx_sc[...] = jnp.zeros_like(wx_sc)

    x = logits_ref[...]                                   # (tb, tc), native dtype
    tb, tc = x.shape
    labels = labels_ref[...]                              # (tb, 1) int32

    # Global class ids covered by this class block.
    cls = k * block_cols + jax.lax.broadcasted_iota(jnp.int32, (tb, tc), 1)

    # Mask OOB class columns of a ragged last class block (select, so garbage /
    # NaN in the padded lanes cannot propagate).  Static no-op otherwise.
    if class_tail:
        valid = cls < num_classes
        xm = jnp.where(valid, x, jnp.asarray(-jnp.inf, x.dtype))
    else:
        xm = x

    # --- online logsumexp across class blocks (f32 accumulators) ---
    m_prev = m_sc[...]
    m_new = jnp.maximum(m_prev,
                        jnp.max(xm, axis=1, keepdims=True).astype(jnp.float32))
    blk_se = jnp.sum(jnp.exp(xm.astype(jnp.float32) - m_new),
                     axis=1, keepdims=True)
    se_new = se_sc[...] * jnp.exp(m_prev - m_new) + blk_se

    # --- fused smoothed-target weighted sum:  sum_c w_c * x_c ---
    off_w = jnp.asarray(epsilon / num_classes, jnp.float32)
    on_w = jnp.asarray(1.0 - epsilon + epsilon / num_classes, jnp.float32)
    contrib = jnp.where(cls == labels, on_w, off_w) * x   # promotes to f32
    if class_tail:
        contrib = jnp.where(valid, contrib, 0.0)
    wx_new = wx_sc[...] + jnp.sum(contrib, axis=1, keepdims=True)

    m_sc[...] = m_new
    se_sc[...] = se_new
    wx_sc[...] = wx_new

    @pl.when(k == pl.num_programs(1) - 1)
    def _finalize():
        log_z = m_new + jnp.log(se_new)                   # (tb, 1)
        loss_rows = log_z - wx_new                        # (tb, 1)
        # Mask padded rows of a ragged last batch block (select -> NaN-safe).
        row_ids = i * block_rows + jax.lax.broadcasted_iota(jnp.int32, (tb, 1), 0)
        loss_rows = jnp.where(row_ids < total_rows, loss_rows, 0.0)
        partial = jnp.sum(loss_rows)
        # Scalar at lane [0,0] of a lane-dense tile, zeros elsewhere -> wrapper
        # does one exact dense jnp.sum over all partial tiles (no strided gather).
        sub = jax.lax.broadcasted_iota(jnp.int32, (1, 8, 128), 1)
        lane = jax.lax.broadcasted_iota(jnp.int32, (1, 8, 128), 2)
        partial_ref[...] = jnp.where((sub == 0) & (lane == 0),
                                     partial, 0.0).astype(jnp.float32)


def cross_entropy(logits, labels, *, epsilon=0.1, block_rows=None, block_cols=None):
    """Pallas-TPU label-smoothed cross entropy.

    logits: (B, C) float array (any float dtype, DMA'd natively)
    labels: (B,)   int array
    returns scalar f32 loss = (-smoothed_targets * log_softmax(logits)).mean(0).sum()
    Note: the PyTorch module hardcodes eps=0.1 for the one-hot factor and uses
    self.epsilon for the uniform term; with the default epsilon=0.1 they agree.
    """
    B, C = logits.shape
    itemsize = jnp.dtype(logits.dtype).itemsize

    vmem_cap = _vmem_capacity_bytes()
    vmem_limit = int(vmem_cap * 3 // 4)     # headroom (v7x: ~48 MiB, v5e/v6e: ~96 MiB)

    tb, tc = _pick_tiles(B, C, itemsize, vmem_limit, block_rows, block_cols)
    grid = (pl.cdiv(B, tb), pl.cdiv(C, tc))

    labels2d = labels.reshape(B, 1).astype(jnp.int32)

    kernel = functools.partial(
        _ce_kernel,
        epsilon=float(epsilon),
        num_classes=C,
        total_rows=B,            # global B: row mask / divisor use the true batch
        block_rows=tb,
        block_cols=tc,
        class_tail=(C % tc != 0),
    )

    partials = pl.pallas_call(
        kernel,
        out_shape=jax.ShapeDtypeStruct((grid[0], 8, 128), jnp.float32),
        grid=grid,
        in_specs=[
            pl.BlockSpec((tb, tc), lambda i, k: (i, k)),   # logits tile
            pl.BlockSpec((tb, 1), lambda i, k: (i, 0)),    # labels tile
        ],
        out_specs=pl.BlockSpec((1, 8, 128), lambda i, k: (i, 0, 0)),
        scratch_shapes=[
            pltpu.VMEM((tb, 1), jnp.float32),   # running max
            pltpu.VMEM((tb, 1), jnp.float32),   # running sum-exp
            pltpu.VMEM((tb, 1), jnp.float32),   # running weighted sum
        ],
        compiler_params=pltpu.CompilerParams(
            dimension_semantics=("parallel", "arbitrary"),
            vmem_limit_bytes=vmem_limit,
        ),
    )(logits, labels2d)

    # Final reduction over per-batch-block partials; divide by the GLOBAL batch.
    return jnp.sum(partials) / B


def _reference(logits, labels, epsilon=0.1):
    # Pure-JAX reference mirroring the PyTorch module exactly.
    B, C = logits.shape
    log_probs = jax.nn.log_softmax(logits.astype(jnp.float32), axis=1)
    onehot = jax.nn.one_hot(labels, C, dtype=jnp.float32)
    targets = (1.0 - epsilon) * onehot + epsilon / C
    return jnp.sum(jnp.mean(-targets * log_probs, axis=0))


if __name__ == "__main__":
    key = jax.random.PRNGKey(0)
    k1, k2, k3, k4, k5, k6 = jax.random.split(key, 6)

    # Case 1: f32 logits, ragged batch -> multi-block "parallel" batch grid,
    # padded-row masking, single class block, partial-tile reduction.
    B1, C1 = 20, 32
    logits1 = jax.random.normal(k1, (B1, C1), dtype=jnp.float32)
    labels1 = jax.random.randint(k2, (B1,), 0, C1, dtype=jnp.int32)
    loss1 = jax.block_until_ready(cross_entropy(logits1, labels1, epsilon=0.1))
    ref1 = _reference(logits1, labels1, epsilon=0.1)
    assert jnp.allclose(loss1, ref1, rtol=1e-4, atol=1e-5), (loss1, ref1)

    # Case 2: bf16 logits DMA'd natively (no wrapper upcast).
    B2, C2 = 16, 128
    logits2 = jax.random.normal(k3, (B2, C2), dtype=jnp.float32).astype(jnp.bfloat16)
    labels2 = jax.random.randint(k4, (B2,), 0, C2, dtype=jnp.int32)
    loss2 = jax.block_until_ready(cross_entropy(logits2, labels2, epsilon=0.1))
    ref2 = _reference(logits2, labels2, epsilon=0.1)
    assert jnp.allclose(loss2, ref2, rtol=1e-4, atol=1e-4), (loss2, ref2)

    # Case 3: forced class-axis tiling with a ragged class tail -> exercises
    # the online logsumexp across class blocks + both tail masks.
    B3, C3 = 20, 320
    logits3 = jax.random.normal(k5, (B3, C3), dtype=jnp.float32)
    labels3 = jax.random.randint(k6, (B3,), 0, C3, dtype=jnp.int32)
    loss3 = jax.block_until_ready(
        cross_entropy(logits3, labels3, epsilon=0.1, block_rows=16, block_cols=128))
    ref3 = _reference(logits3, labels3, epsilon=0.1)
    assert jnp.allclose(loss3, ref3, rtol=1e-4, atol=1e-5), (loss3, ref3)

    print("KERNEL_OK")
</pallas_src>

<mosaic_0001>
module attributes {stable_mosaic.version = 11 : i64} {
  func.func @_ce_kernel(%arg0: i32, %arg1: i32, %arg2: memref<16x32xf32, #tpu.memory_space<vmem>>, %arg3: memref<16x1xi32, #tpu.memory_space<vmem>>, %arg4: memref<1x8x128xf32, #tpu.memory_space<vmem>>, %arg5: memref<16x1xf32, #tpu.memory_space<vmem>>, %arg6: memref<16x1xf32, #tpu.memory_space<vmem>>, %arg7: memref<16x1xf32, #tpu.memory_space<vmem>>) attributes {dimension_semantics = [#tpu.dimension_semantics<parallel>, #tpu.dimension_semantics<arbitrary>], iteration_bounds = array<i64: 2, 1>, scalar_prefetch = 0 : i64, scratch_operands = 3 : i64, tpu.core_type = #tpu.core_type<tc>, window_params = [{transform_indices = @transform_0, window_bounds = array<i64: 16, 32>}, {transform_indices = @transform_1, window_bounds = array<i64: 16, 1>}, {transform_indices = @transform_2, window_bounds = array<i64: 1, 8, 128>}]} {
    %c0_i32 = arith.constant 0 : i32
    %0 = arith.cmpi eq, %arg1, %c0_i32 : i32
    %1 = arith.extui %0 : i1 to i32
    %c0_i32_0 = arith.constant 0 : i32
    %2 = arith.cmpi ne, %1, %c0_i32_0 : i32
    scf.if %2 {
      %cst_22 = arith.constant 0xFF800000 : f32
      %39 = vector.broadcast %cst_22 : f32 to vector<16x1xf32>
      %c0_23 = arith.constant 0 : index
      %c0_24 = arith.constant 0 : index
      %40 = vector.load %arg5[%c0_23, %c0_24] : memref<16x1xf32, #tpu.memory_space<vmem>>, vector<16x1xf32>
      tpu.vector_store %arg5[%c0_23, %c0_24], %39 {strides = array<i32>} : memref<16x1xf32, #tpu.memory_space<vmem>>, vector<16x1xf32>,
      %cst_25 = arith.constant 0.000000e+00 : f32
      %41 = vector.broadcast %cst_25 : f32 to vector<16x1xf32>
      %c0_26 = arith.constant 0 : index
      %c0_27 = arith.constant 0 : index
      %42 = vector.load %arg6[%c0_26, %c0_27] : memref<16x1xf32, #tpu.memory_space<vmem>>, vector<16x1xf32>
      tpu.vector_store %arg6[%c0_26, %c0_27], %41 {strides = array<i32>} : memref<16x1xf32, #tpu.memory_space<vmem>>, vector<16x1xf32>,
      %cst_28 = arith.constant 0.000000e+00 : f32
      %43 = vector.broadcast %cst_28 : f32 to vector<16x1xf32>
      %c0_29 = arith.constant 0 : index
      %c0_30 = arith.constant 0 : index
      %44 = vector.load %arg7[%c0_29, %c0_30] : memref<16x1xf32, #tpu.memory_space<vmem>>, vector<16x1xf32>
      tpu.vector_store %arg7[%c0_29, %c0_30], %43 {strides = array<i32>} : memref<16x1xf32, #tpu.memory_space<vmem>>, vector<16x1xf32>,
    } else {
    }
    %c0 = arith.constant 0 : index
    %c0_1 = arith.constant 0 : index
    %3 = vector.load %arg2[%c0, %c0_1] : memref<16x32xf32, #tpu.memory_space<vmem>>, vector<16x32xf32>
    %c0_2 = arith.constant 0 : index
    %c0_3 = arith.constant 0 : index
    %4 = vector.load %arg3[%c0_2, %c0_3] : memref<16x1xi32, #tpu.memory_space<vmem>>, vector<16x1xi32>
    %c32_i32 = arith.constant 32 : i32
    %5 = arith.muli %arg1, %c32_i32 : i32
    %6 = tpu.iota {dimensions = array<i32: 1>} : vector<16x32xi32>
    %7 = vector.broadcast %5 : i32 to vector<16x32xi32>
    %8 = arith.addi %7, %6 : vector<16x32xi32>
    %c0_4 = arith.constant 0 : index
    %c0_5 = arith.constant 0 : index
    %9 = vector.load %arg5[%c0_4, %c0_5] : memref<16x1xf32, #tpu.memory_space<vmem>>, vector<16x1xf32>
    %cst = arith.constant dense<0xFF800000> : vector<16xf32>
    %10 = vector.multi_reduction <maximumf>, %3, %cst [1] : vector<16x32xf32> to vector<16xf32>
    %11 = vector.shape_cast %10 : vector<16xf32> to vector<16x1xf32>
    %12 = arith.maximumf %9, %11 : vector<16x1xf32>
    %13 = vector.broadcast %12 : vector<16x1xf32> to vector<16x32xf32>
    %14 = arith.subf %3, %13 : vector<16x32xf32>
    %15 = math.exp %14 : vector<16x32xf32>
    %cst_6 = arith.constant dense<0.000000e+00> : vector<16xf32>
    %16 = vector.multi_reduction <add>, %15, %cst_6 [1] : vector<16x32xf32> to vector<16xf32>
    %17 = vector.shape_cast %16 : vector<16xf32> to vector<16x1xf32>
    %c0_7 = arith.constant 0 : index
    %c0_8 = arith.constant 0 : index
    %18 = vector.load %arg6[%c0_7, %c0_8] : memref<16x1xf32, #tpu.memory_space<vmem>>, vector<16x1xf32>
    %19 = arith.subf %9, %12 : vector<16x1xf32>
    %20 = math.exp %19 : vector<16x1xf32>
    %21 = arith.mulf %18, %20 : vector<16x1xf32>
    %22 = arith.addf %21, %17 : vector<16x1xf32>
    %23 = vector.broadcast %4 : vector<16x1xi32> to vector<16x32xi32>
    %24 = arith.cmpi eq, %8, %23 : vector<16x32xi32>
    %cst_9 = arith.constant 0.903124988 : f32
    %cst_10 = arith.constant 3.125000e-03 : f32
    %25 = vector.broadcast %cst_9 : f32 to vector<16x32xf32>
    %26 = vector.broadcast %cst_10 : f32 to vector<16x32xf32>
    %27 = arith.select %24, %25, %26 : vector<16x32xi1>, vector<16x32xf32>
    %28 = arith.mulf %27, %3 : vector<16x32xf32>
    %c0_11 = arith.constant 0 : index
    %c0_12 = arith.constant 0 : index
    %29 = vector.load %arg7[%c0_11, %c0_12] : memref<16x1xf32, #tpu.memory_space<vmem>>, vector<16x1xf32>
    %cst_13 = arith.constant dense<0.000000e+00> : vector<16xf32>
    %30 = vector.multi_reduction <add>, %28, %cst_13 [1] : vector<16x32xf32> to vector<16xf32>
    %31 = vector.shape_cast %30 : vector<16xf32> to vector<16x1xf32>
    %32 = arith.addf %29, %31 : vector<16x1xf32>
    %c0_14 = arith.constant 0 : index
    %c0_15 = arith.constant 0 : index
    %33 = vector.load %arg5[%c0_14, %c0_15] : memref<16x1xf32, #tpu.memory_space<vmem>>, vector<16x1xf32>
    tpu.vector_store %arg5[%c0_14, %c0_15], %12 {strides = array<i32>} : memref<16x1xf32, #tpu.memory_space<vmem>>, vector<16x1xf32>,
    %c0_16 = arith.constant 0 : index
    %c0_17 = arith.constant 0 : index
    %34 = vector.load %arg6[%c0_16, %c0_17] : memref<16x1xf32, #tpu.memory_space<vmem>>, vector<16x1xf32>
    tpu.vector_store %arg6[%c0_16, %c0_17], %22 {strides = array<i32>} : memref<16x1xf32, #tpu.memory_space<vmem>>, vector<16x1xf32>,
    %c0_18 = arith.constant 0 : index
    %c0_19 = arith.constant 0 : index
    %35 = vector.load %arg7[%c0_18, %c0_19] : memref<16x1xf32, #tpu.memory_space<vmem>>, vector<16x1xf32>
    tpu.vector_store %arg7[%c0_18, %c0_19], %32 {strides = array<i32>} : memref<16x1xf32, #tpu.memory_space<vmem>>, vector<16x1xf32>,
    %c0_i32_20 = arith.constant 0 : i32
    %36 = arith.cmpi eq, %arg1, %c0_i32_20 : i32
    %37 = arith.extui %36 : i1 to i32
    %c0_i32_21 = arith.constant 0 : i32
    %38 = arith.cmpi ne, %37, %c0_i32_21 : i32
    scf.if %38 {
      %39 = math.log %22 : vector<16x1xf32>
      %40 = arith.addf %12, %39 : vector<16x1xf32>
      %41 = arith.subf %40, %32 : vector<16x1xf32>
      %c16_i32 = arith.constant 16 : i32
      %42 = arith.muli %arg0, %c16_i32 : i32
      %43 = tpu.iota {dimensions = array<i32: 0>} : vector<16x1xi32>
      %44 = vector.broadcast %42 : i32 to vector<16x1xi32>
      %45 = arith.addi %44, %43 : vector<16x1xi32>
      %c20_i32 = arith.constant 20 : i32
      %46 = vector.broadcast %c20_i32 : i32 to vector<16x1xi32>
      %47 = arith.cmpi slt, %45, %46 : vector<16x1xi32>
      %cst_22 = arith.constant 0.000000e+00 : f32
      %48 = vector.broadcast %cst_22 : f32 to vector<16x1xf32>
      %49 = arith.select %47, %41, %48 : vector<16x1xi1>, vector<16x1xf32>
      %50 = vector.shape_cast %49 : vector<16x1xf32> to vector<1x16x1xf32>
      %cst_23 = arith.constant dense<0.000000e+00> : vector<1xf32>
      %51 = vector.multi_reduction <add>, %50, %cst_23 [1, 2] : vector<1x16x1xf32> to vector<1xf32>
      %52 = vector.shape_cast %51 : vector<1xf32> to vector<1x1x1xf32>
      %53 = vector.extract %52[0, 0, 0] : f32 from vector<1x1x1xf32>
      %54 = tpu.iota {dimensions = array<i32: 1>} : vector<1x8x128xi32>
      %55 = tpu.iota {dimensions = array<i32: 2>} : vector<1x8x128xi32>
      %c0_i32_24 = arith.constant 0 : i32
      %56 = vector.broadcast %c0_i32_24 : i32 to vector<1x8x128xi32>
      %57 = arith.cmpi eq, %54, %56 : vector<1x8x128xi32>
      %c0_i32_25 = arith.constant 0 : i32
      %58 = vector.broadcast %c0_i32_25 : i32 to vector<1x8x128xi32>
      %59 = arith.cmpi eq, %55, %58 : vector<1x8x128xi32>
      %60 = arith.andi %57, %59 : vector<1x8x128xi1>
      %cst_26 = arith.constant 0.000000e+00 : f32
      %61 = vector.broadcast %53 : f32 to vector<1x8x128xf32>
      %62 = vector.broadcast %cst_26 : f32 to vector<1x8x128xf32>
      %63 = arith.select %60, %61, %62 : vector<1x8x128xi1>, vector<1x8x128xf32>
      %c0_27 = arith.constant 0 : index
      %c0_28 = arith.constant 0 : index
      %c0_29 = arith.constant 0 : index
      %64 = vector.load %arg4[%c0_27, %c0_28, %c0_29] : memref<1x8x128xf32, #tpu.memory_space<vmem>>, vector<1x8x128xf32>
      tpu.vector_store %arg4[%c0_27, %c0_28, %c0_29], %63 {strides = array<i32>} : memref<1x8x128xf32, #tpu.memory_space<vmem>>, vector<1x8x128xf32>,
    } else {
    }
    return
  }
  func.func @transform_0(%arg0: i32, %arg1: i32) -> (i32, i32) {
    %c0_i32 = arith.constant 0 : i32
    return %arg0, %arg1 : i32, i32
  }
  func.func @transform_1(%arg0: i32, %arg1: i32) -> (i32, i32) {
    %c0_i32 = arith.constant 0 : i32
    %c0_i32_0 = arith.constant 0 : i32
    return %arg0, %c0_i32 : i32, i32
  }
  func.func @transform_2(%arg0: i32, %arg1: i32) -> (i32, i32, i32) {
    %c0_i32 = arith.constant 0 : i32
    %c0_i32_0 = arith.constant 0 : i32
    %c0_i32_1 = arith.constant 0 : i32
    return %arg0, %c0_i32, %c0_i32_0 : i32, i32, i32
  }
}

</mosaic_0001>

<llo_original>
// kernel: tpu_custom_call.1
$region0: #{tpu_custom_call.1}
  #allocation0 [shape = 'u32[]', space=smem, size = 0x4, offset = 0x4, fixed_abs, tag = 'smem constant byte address 0x4 - core index']
  #allocation1 [shape = 'u32[144,128]{1,0:T(1,128)}', space=vmem, size = 0x12000, scoped, tag = 'internal scratch']
  #allocation2 [shape = 'f32[16,1]{1,0:T(8,128)}', space=vmem, size = 0x2000, scoped, tag = 'scratch operand']
  #allocation3 [shape = 'f32[16,1]{1,0:T(8,128)}', space=vmem, size = 0x2000, scoped, tag = 'scratch operand']
  #allocation4 [shape = 'f32[16,1]{1,0:T(8,128)}', space=vmem, size = 0x2000, scoped, tag = 'scratch operand']
  %s0 = inlined_call_operand.vmem [shape: f32[20,32], index: 0, kind: input, shape index: {}]
  %s1 = inlined_call_operand.vmem [shape: s32[20,1], index: 1, kind: input, shape index: {}]
  %s2 = inlined_call_operand.hbm [shape: f32[2,8,128], index: 2, kind: output, shape index: {}]
  %s3 = sld [smem:[#allocation0]]
  $region49: #{tpu_custom_call.1} parent=0
    _
  %s5 = ssub.s32 1, %s3
  %s6 = scalar_select 0, %s5, %s3
  $region1: #{tpu_custom_call.1} parent=0
    #allocation5 [shape = 'u8[8192]{0}', space=vmem, size = 0x2000, scoped, tag = 'output window, operand 0']
    #allocation6 [shape = 's32[2]{0}', space=sflag, size = 0x8, scoped, tag = 'scoped memory for tpu_custom_call.1']
    %7 = vsyncpa [#allocation6], 0
    %s8 = scalar_lea.sflag [#allocation6], 1
    %9 = vsyncpa %s8, 0
    loop: start=0, step=1, limit=4
    $region2: #{tpu_custom_call.1} parent=1 // loop_pre_header
      _
    $region3: #{tpu_custom_call.1} parent=1 // loop_header
      %s11 = sphi 0, %s15
      %p12 = scmp.ge.s32.totalorder %s11, 4
      %s18 = sphi 0, %s30
      %s19 = sphi 0, %s26
      %s20 = sphi 0, %s18
      %s21 = sphi 0, %s19
      %s22 = sphi 0, %s20
      %s23 = sphi 0, %s21
      %s35 = sphi 0, %s37
      %s38 = sphi 0, %s35
      %s39 = sphi 0, %s38
      %s55 = sphi 0, %s39
      %s61 = sphi 0, %s63
      %s64 = sphi 0, %s61
      %s65 = sphi 0, %s64
      %s81 = sphi 0, %s65
      %s87 = sphi 0, %s89
      %s90 = sphi 0, %s87
      %s91 = sphi 0, %s90
      %s107 = sphi 0, %s91
    $region4: #{tpu_custom_call.1} parent=1 // loop_header_branch
      %14 = sbr.rel (%p12) target = $region8
    $region5: #{tpu_custom_call.1} parent=1 // loop_body
      %s16 = ssub.s32 %s11, 1
      %s17 = ssub.s32 %s11, 2
      %s24 = sadd.s32 1, %s19
      %p25 = scmp.ge.s32.totalorder %s24, 1
      %s26 = scalar_select %p25, 0, %s24
      %s27 = sadd.s32 1, %s18
      %s28 = scalar_select %p25, %s27, %s18
      %p29 = scmp.ge.s32.totalorder %s28, 2
      %s30 = scalar_select %p29, 0, %s28
      %s31 = ssub.s32 %s18, %s30
      %s32 = ssub.s32 %s19, %s26
      %s33 = sor.u32 %s31, %s32
      %p34 = scmp.eq.s32.totalorder %s33, 0
      %s36 = sadd.s32 %s35, 1
      %s37 = scalar_select %p34, %s35, %s36
      %p40 = pneg %p34
      %p41 = scmp.eq.s32.totalorder %s11, 1
      %p42 = por %p40, %p41
      %p43 = scmp.ne.s32.totalorder %s35, %s38
      %p44 = scmp.eq.s32.totalorder %s11, 0
      %p45 = por %p43, %p44
      %p46 = scmp.ne.s32.totalorder %s35, %s38
      %p47 = scmp.eq.s32.totalorder %s16, 1
      %p48 = por %p46, %p47
      %p49 = scmp.ne.s32.totalorder %s38, %s39
      %p50 = scmp.eq.s32.totalorder %s16, 0
      %p51 = por %p49, %p50
      %p52 = scmp.ne.s32.totalorder %s38, %s39
      %p53 = scmp.eq.s32.totalorder %s17, 1
      %p54 = por %p52, %p53
      %p56 = scmp.ne.s32.totalorder %s39, %s55
      %p57 = scmp.eq.s32.totalorder %s17, 0
      %p58 = por %p56, %p57
      %s59 = ssub.s32 %s18, %s30
      %p60 = scmp.eq.s32.totalorder %s59, 0
      %s62 = sadd.s32 %s61, 1
      %s63 = scalar_select %p60, %s61, %s62
      %p66 = pneg %p60
      %p67 = scmp.eq.s32.totalorder %s11, 1
      %p68 = por %p66, %p67
      %p69 = scmp.ne.s32.totalorder %s61, %s64
      %p70 = scmp.eq.s32.totalorder %s11, 0
      %p71 = por %p69, %p70
      %p72 = scmp.ne.s32.totalorder %s61, %s64
      %p73 = scmp.eq.s32.totalorder %s16, 1
      %p74 = por %p72, %p73
      %p75 = scmp.ne.s32.totalorder %s64, %s65
      %p76 = scmp.eq.s32.totalorder %s16, 0
      %p77 = por %p75, %p76
      %p78 = scmp.ne.s32.totalorder %s64, %s65
      %p79 = scmp.eq.s32.totalorder %s17, 1
      %p80 = por %p78, %p79
      %p82 = scmp.ne.s32.totalorder %s65, %s81
      %p83 = scmp.eq.s32.totalorder %s17, 0
      %p84 = por %p82, %p83
      %s85 = ssub.s32 %s18, %s30
      %p86 = scmp.eq.s32.totalorder %s85, 0
      %s88 = sadd.s32 %s87, 1
      %s89 = scalar_select %p86, %s87, %s88
      %p92 = pneg %p86
      %p93 = scmp.eq.s32.totalorder %s11, 1
      %p94 = por %p92, %p93
      %p95 = scmp.ne.s32.totalorder %s87, %s90
      %p96 = scmp.eq.s32.totalorder %s11, 0
      %p97 = por %p95, %p96
      %p98 = scmp.ne.s32.totalorder %s87, %s90
      %p99 = scmp.eq.s32.totalorder %s16, 1
      %p100 = por %p98, %p99
      %p101 = scmp.ne.s32.totalorder %s90, %s91
      %p102 = scmp.eq.s32.totalorder %s16, 0
      %p103 = por %p101, %p102
      %p104 = scmp.ne.s32.totalorder %s90, %s91
      %p105 = scmp.eq.s32.totalorder %s17, 1
      %p106 = por %p104, %p105
      %p108 = scmp.ne.s32.totalorder %s91, %s107
      %p109 = scmp.eq.s32.totalorder %s17, 0
      %p110 = por %p108, %p109
      %p111 = scmp.le.s32.totalorder 1, %s11
      %p112 = scmp.lt.s32.totalorder %s11, 3
      %p113 = pnand %p111, %p112
      %p114 = pneg %p113
      // Predicated region
      $region9: #{tpu_custom_call.1} parent=5 // pred_check
        _
      $region10: #{tpu_custom_call.1} parent=5 // pred_check_branch
        %116 = sbr.rel (%p113) target = $region12
      $region11: #{tpu_custom_call.1} parent=5 // pred_region
        %s117 = ssub.s32 %s11, 1
      $region12: #{tpu_custom_call.1} parent=5 // pred_fallthru
        _
      %p118 = scmp.lt.s32.totalorder %s11, 2
      // Predicated region
      $region13: #{tpu_custom_call.1} parent=5 // pred_check
        %p119 = pneg %p118
      $region14: #{tpu_custom_call.1} parent=5 // pred_check_branch
        %121 = sbr.rel (%p119) target = $region16
      $region15: #{tpu_custom_call.1} parent=5 // pred_region
        // Predicated region
        $region17: #{tpu_custom_call.1} parent=15 // pred_check
          %p122 = pneg %p45
        $region18: #{tpu_custom_call.1} parent=15 // pred_check_branch
          %124 = sbr.rel (%p122) target = $region20
        $region19: #{tpu_custom_call.1} parent=15 // pred_region
          %s125 = smul.u32 2, %s18
          %s126 = ssub.s32 3, %s125
          %p127 = scmp.lt.s32.totalorder %s126, 2
          %s128 = scalar_select %p127, %s126, 2
          %s129 = smul.u32 128, %s128
          %p130 = scmp.lt.s32.totalorder %s125, 2
          %s131 = scalar_select %p130, %s125, 2
          %p132 = scmp.lt.s32.totalorder %s19, 0
          %s133 = scalar_select %p132, %s19, 0
          %s134 = sadd.s32 %s133, %s131
          %s135 = smul.addr %s134, 8
          %s136 = scalar_lea.vmem %s0, %s135
          %s137 = smul.u32 2, %s18
          %s138 = ssub.s32 3, %s137
          %p139 = scmp.lt.s32.totalorder %s138, 2
          %s140 = scalar_select %p139, %s138, 2
          %s141 = smul.u32 128, %s140
        $region20: #{tpu_custom_call.1} parent=15 // pred_fallthru
          _
        // Predicated region
        $region21: #{tpu_custom_call.1} parent=15 // pred_check
          %p142 = pneg %p71
        $region22: #{tpu_custom_call.1} parent=15 // pred_check_branch
          %144 = sbr.rel (%p142) target = $region24
        $region23: #{tpu_custom_call.1} parent=15 // pred_region
          %s145 = smul.u32 2, %s18
          %s146 = ssub.s32 3, %s145
          %p147 = scmp.lt.s32.totalorder %s146, 2
          %s148 = scalar_select %p147, %s146, 2
          %s149 = smul.u32 128, %s148
          %p150 = scmp.lt.s32.totalorder %s145, 2
          %s151 = scalar_select %p150, %s145, 2
          %s152 = smul.addr %s151, 8
          %s153 = scalar_lea.vmem %s1, %s152
          %s154 = smul.u32 2, %s18
          %s155 = ssub.s32 3, %s154
          %p156 = scmp.lt.s32.totalorder %s155, 2
          %s157 = scalar_select %p156, %s155, 2
          %s158 = smul.u32 128, %s157
        $region24: #{tpu_custom_call.1} parent=15 // pred_fallthru
          _
      $region16: #{tpu_custom_call.1} parent=5 // pred_fallthru
        _
      %p159 = scmp.le.s32.totalorder 1, %s11
      %p160 = scmp.lt.s32.totalorder %s11, 3
      %p161 = pnand %p159, %p160
      %p162 = pneg %p161
      // Predicated region
      $region25: #{tpu_custom_call.1} parent=5 // pred_check
        _
      $region26: #{tpu_custom_call.1} parent=5 // pred_check_branch
        %164 = sbr.rel (%p161) target = $region28
      $region27: #{tpu_custom_call.1} parent=5 // pred_region
        %s165 = ssub.s32 %s11, 1
        %s166 = smul.u32 2, %s20
        %s167 = ssub.s32 3, %s166
        %p168 = scmp.lt.s32.totalorder %s167, 2
        %s169 = scalar_select %p168, %s167, 2
        %s170 = smul.u32 128, %s169
        %p171 = scmp.lt.s32.totalorder %s166, 2
        %s172 = scalar_select %p171, %s166, 2
        %p173 = scmp.lt.s32.totalorder %s21, 0
        %s174 = scalar_select %p173, %s21, 0
        %s175 = sadd.s32 %s174, %s172
        %s176 = smul.addr %s175, 8
        %s177 = scalar_lea.vmem %s0, %s176
        %p178 = pneg %p51
        %p179 = pneg %p48
        %s180 = smul.u32 2, %s20
        %s181 = ssub.s32 3, %s180
        %p182 = scmp.lt.s32.totalorder %s181, 2
        %s183 = scalar_select %p182, %s181, 2
        %s184 = smul.u32 128, %s183
        %p185 = scmp.lt.s32.totalorder %s180, 2
        %s186 = scalar_select %p185, %s180, 2
        %s187 = smul.addr %s186, 8
        %s188 = scalar_lea.vmem %s1, %s187
        %p189 = pneg %p77
        %p190 = pneg %p74
        %p191 = pneg %p103
        %p192 = pneg %p100
        %s193 = sand.u32 %s90, 1
        %s194 = scalar_lea.sflag [#allocation6], %s193
        %s195 = sand.u32 %s90, 1
        %s196 = smul.addr %s195, 8
        %s197 = scalar_lea.vmem [#allocation5], %s196
        %s198 = smul.u32 2, %s20
        %s199 = ssub.s32 3, %s198
        %p200 = scmp.lt.s32.totalorder %s199, 2
        %s201 = scalar_select %p200, %s199, 2
        %s202 = smul.u32 128, %s201
        %p203 = scmp.lt.s32.totalorder %s198, 2
        %s204 = scalar_select %p203, %s198, 2
        %p205 = scmp.lt.s32.totalorder %s21, 0
        %s206 = scalar_select %p205, %s21, 0
        %s207 = sadd.s32 %s206, %s204
        %s208 = smul.addr %s207, 8
        %s209 = scalar_lea.vmem %s0, %s208
        %s210 = smul.u32 2, %s20
        %s211 = ssub.s32 3, %s210
        %p212 = scmp.lt.s32.totalorder %s211, 2
        %s213 = scalar_select %p212, %s211, 2
        %s214 = smul.u32 128, %s213
        %s215 = smul.u32 2, %s20
        %s216 = ssub.s32 3, %s215
        %p217 = scmp.lt.s32.totalorder %s216, 2
        %s218 = scalar_select %p217, %s216, 2
        %s219 = smul.u32 128, %s218
        %p220 = scmp.lt.s32.totalorder %s215, 2
        %s221 = scalar_select %p220, %s215, 2
        %s222 = smul.addr %s221, 8
        %s223 = scalar_lea.vmem %s1, %s222
        %s224 = smul.u32 2, %s20
        %s225 = ssub.s32 3, %s224
        %p226 = scmp.lt.s32.totalorder %s225, 2
        %s227 = scalar_select %p226, %s225, 2
        %s228 = smul.u32 128, %s227
        %p229 = scmp.eq.s32.totalorder %s21, 0
        // Predicated region
        $region29: #{tpu_custom_call.1} parent=27 // pred_check
          %p230 = pneg %p229
        $region30: #{tpu_custom_call.1} parent=27 // pred_check_branch
          %232 = sbr.rel (%p230) target = $region32
        $region31: #{tpu_custom_call.1} parent=27 // pred_region
          %vm233 = vcmask 7168
          %234 = vst.msk [vmem:[#allocation2] sm:$0xff] %vm233, -inf
          %235 = vst.msk [vmem:[#allocation2 + $0x8] sm:$0xff] %vm233, -inf
          %236 = vst.msk [vmem:[#allocation3] sm:$0xff] %vm233, 0.0
          %237 = vst.msk [vmem:[#allocation3 + $0x8] sm:$0xff] %vm233, 0.0
          %238 = vst.msk [vmem:[#allocation4] sm:$0xff] %vm233, 0.0
          %239 = vst.msk [vmem:[#allocation4 + $0x8] sm:$0xff] %vm233, 0.0
        $region32: #{tpu_custom_call.1} parent=27 // pred_fallthru
          _
        %v240 = vld [vmem:[%s209] sm:$0xff]
        %v241 = vld [vmem:[%s209 + $0x8] sm:$0xff]
        %v242 = vld [vmem:[%s223] sm:$0xff]
        %v243 = vld [vmem:[%s223 + $0x8] sm:$0xff]
        %s244 = smul.u32 %s21, 32
        %v245 = vlaneseq
        %v246 = vand.u32 %v245, 127
        %v247 = vstv %s244
        %v248 = vadd.s32 %v247, %v246
        %v249 = vld [vmem:[#allocation2] sm:$0xff]
        %v250 = vld [vmem:[#allocation2 + $0x8] sm:$0xff]
        %vm251 = vcmask 261120
        %v252 = vsel %vm251, %v240, -inf
        %253 = vmax.xlane.f32.xlu0 %v252
        %v254 = vpop.xlane.xlu0 %253
        %v255 = vsel %vm251, %v241, -inf
        %256 = vmax.xlane.f32.xlu0 %v255
        %v257 = vpop.xlane.xlu0 %256
        %v258 = vmax.f32 %v249, %v254
        %v259 = vmax.f32 %v250, %v257
        %261 = vset.pattern.permute.xlu0 0
        %262 = vperm.xlu0 %261, %v258
        %v263 = vpop.permute.xlu0 %262
        %266 = vset.pattern.permute.xlu0 0
        %267 = vperm.xlu0 %266, %v259
        %v268 = vpop.permute.xlu0 %267
        %v270 = vsub.f32 %v240, %v263
        %v271 = vsub.f32 %v241, %v268
        %v272 = vmul.f32 %v270, 1.442695
        %v273 = vpow.pop %v272
        %v274 = vmul.f32 %v271, 1.442695
        %v275 = vpow.pop %v274
        %v276 = vsel %vm251, %v273, 0.0
        %277 = vadd.xlane.f32.xlu0 %v276
        %v278 = vpop.xlane.xlu0 %277
        %v279 = vsel %vm251, %v275, 0.0
        %280 = vadd.xlane.f32.xlu0 %v279
        %v281 = vpop.xlane.xlu0 %280
        %v282 = vld [vmem:[#allocation3] sm:$0xff]
        %v283 = vld [vmem:[#allocation3 + $0x8] sm:$0xff]
        %v284 = vsub.f32 %v249, %v258
        %v285 = vsub.f32 %v250, %v259
        %v286 = vmul.f32 %v284, 1.442695
        %v287 = vpow.pop %v286
        %v288 = vmul.f32 %v285, 1.442695
        %v289 = vpow.pop %v288
        %v290 = vmul.f32 %v282, %v287
        %v291 = vmul.f32 %v283, %v289
        %v292 = vadd.f32 %v290, %v278
        %v293 = vadd.f32 %v291, %v281
        %294 = vset.pattern.permute.xlu0 0
        %295 = vperm.xlu0 %294, %v242
        %v296 = vpop.permute.xlu0 %295
        %297 = vset.pattern.permute.xlu0 0
        %298 = vperm.xlu0 %297, %v243
        %v299 = vpop.permute.xlu0 %298
        %vm300 = vcmp.eq.s32.totalorder %v248, %v296
        %vm301 = vcmp.eq.s32.totalorder %v248, %v299
        %v302 = vsel %vm300, 0.903125, 0.003125
        %v303 = vsel %vm301, 0.903125, 0.003125
        %v304 = vmul.f32 %v302, %v240
        %v305 = vmul.f32 %v303, %v241
        %v306 = vld [vmem:[#allocation4] sm:$0xff]
        %v307 = vld [vmem:[#allocation4 + $0x8] sm:$0xff]
        %v308 = vsel %vm251, %v304, 0.0
        %309 = vadd.xlane.f32.xlu0 %v308
        %v310 = vpop.xlane.xlu0 %309
        %v311 = vsel %vm251, %v305, 0.0
        %312 = vadd.xlane.f32.xlu0 %v311
        %v313 = vpop.xlane.xlu0 %312
        %v314 = vadd.f32 %v306, %v310
        %v315 = vadd.f32 %v307, %v313
        %vm316 = vcmask 7168
        %317 = vst.msk [vmem:[#allocation2] sm:$0xff] %vm316, %v258
        %318 = vst.msk [vmem:[#allocation2 + $0x8] sm:$0xff] %vm316, %v259
        %319 = vst.msk [vmem:[#allocation3] sm:$0xff] %vm316, %v292
        %320 = vst.msk [vmem:[#allocation3 + $0x8] sm:$0xff] %vm316, %v293
        %321 = vst.msk [vmem:[#allocation4] sm:$0xff] %vm316, %v314
        %322 = vst.msk [vmem:[#allocation4 + $0x8] sm:$0xff] %vm316, %v315
        // Predicated region
        $region33: #{tpu_custom_call.1} parent=27 // pred_check
          %p323 = pneg %p229
        $region34: #{tpu_custom_call.1} parent=27 // pred_check_branch
          %325 = sbr.rel (%p323) target = $region36
        $region35: #{tpu_custom_call.1} parent=27 // pred_region
          %v326 = vlog2.pop %v292
          %v327 = vmul.f32 %v326, 0.6931472
          %v328 = vlog2.pop %v293
          %v329 = vmul.f32 %v328, 0.6931472
          %v330 = vadd.f32 %v258, %v327
          %v331 = vadd.f32 %v259, %v329
          %v332 = vsub.f32 %v330, %v314
          %v333 = vsub.f32 %v331, %v315
          %s334 = smul.u32 %s20, 16
          %v335 = vlaneseq
          %v336 = vshrl.u32 %v335, 7
          %v337 = vadd.s32 %v336, 8
          %v338 = vstv %s334
          %v339 = vadd.s32 %v338, %v336
          %v340 = vadd.s32 %v338, %v337
          %vm341 = vcmp.lt.s32.totalorder %v339, 20
          %vm342 = vcmp.lt.s32.totalorder %v340, 20
          %v343 = vsel %vm341, %v332, 0.0
          %v344 = vsel %vm342, %v333, 0.0
          %v345 = vsel %vm316, %v343, 0.0
          %v346 = vsel %vm316, %v344, 0.0
          %v347 = vadd.f32 %v345, %v346
          %348 = vadd.xlane.f32.xlu0 %v347
          %v349 = vpop.xlane.xlu0 %348
          %v350 = vrot.slane %v349, 4
          %v351 = vadd.f32 %v349, %v350
          %v352 = vrot.slane %v351, 2
          %v353 = vadd.f32 %v351, %v352
          %v354 = vrot.slane %v353, 1
          %v355 = vadd.f32 %v353, %v354
          %s356 = vtos %v355
          %vm357 = vcmp.eq.s32.totalorder %v336, 0
          %vm358 = vcmp.eq.s32.totalorder %v246, 0
          %vm359 = vmand %vm357, %vm358
          %v360 = vstv %s356
          %v361 = vsel %vm359, %v360, 0.0
          %362 = vst [vmem:[%s197] sm:$0xff] %v361
        $region36: #{tpu_custom_call.1} parent=27 // pred_fallthru
          _
        %s363 = sand.u32 %s90, 1
        %s364 = scalar_lea.sflag [#allocation6], %s363
        %s365 = sand.u32 %s90, 1
        %s366 = smul.addr %s365, 8
        %s367 = scalar_lea.vmem [#allocation5], %s366
        // Predicated region
        $region37: #{tpu_custom_call.1} parent=27 // pred_check
          %p368 = pneg %p100
        $region38: #{tpu_custom_call.1} parent=27 // pred_check_branch
          %370 = sbr.rel (%p368) target = $region40
        $region39: #{tpu_custom_call.1} parent=27 // pred_region
          %s372 = ssub.s32 128, 128
          %373 = vsyncadd %s364, %s372
          %s374 = smul.addr %s20, 128
          %s375 = scalar_lea.hbm %s2, %s374
          %s377 = sshll.u32 %s367, 4
          %s378 = int_to_ptr.vmem [resolvable:$true] %s377
          %380 = dma.vmem_to_hbm [thread:$0]  %s378, 128, %s375, %s364
        $region40: #{tpu_custom_call.1} parent=27 // pred_fallthru
          _
      $region28: #{tpu_custom_call.1} parent=5 // pred_fallthru
        _
      %p381 = scmp.le.s32.totalorder 2, %s11
      // Predicated region
      $region41: #{tpu_custom_call.1} parent=5 // pred_check
        %p382 = pneg %p381
      $region42: #{tpu_custom_call.1} parent=5 // pred_check_branch
        %384 = sbr.rel (%p382) target = $region44
      $region43: #{tpu_custom_call.1} parent=5 // pred_region
        %s385 = ssub.s32 %s11, 2
        // Predicated region
        $region45: #{tpu_custom_call.1} parent=43 // pred_check
          %p386 = pneg %p106
        $region46: #{tpu_custom_call.1} parent=43 // pred_check_branch
          %388 = sbr.rel (%p386) target = $region48
        $region47: #{tpu_custom_call.1} parent=43 // pred_region
          %s389 = sand.u32 %s91, 1
          %s390 = scalar_lea.sflag [#allocation6], %s389
          %s391 = sand.u32 %s91, 1
          %s392 = smul.addr %s391, 8
          %s393 = scalar_lea.vmem [#allocation5], %s392
          %394 = dma.done %s390, 128
        $region48: #{tpu_custom_call.1} parent=43 // pred_fallthru
          _
      $region44: #{tpu_custom_call.1} parent=5 // pred_fallthru
        _
    $region6: #{tpu_custom_call.1} parent=1 // loop_footer
      %s15 = sadd.s32 1, %s11
    $region7: #{tpu_custom_call.1} parent=1 // loop_footer_branch
      %10 = sbr.rel target = $region3
    $region8: #{tpu_custom_call.1} parent=1 // loop_exit
      _
    %395 = vsyncpa [#allocation6], 1
    %s396 = scalar_lea.sflag [#allocation6], 1
    %397 = vsyncpa %s396, 1

</llo_original>
